<compile_context>
chip_gen: v7x
topology: tpu7x:2x2x1
jax: 0.10.0
libtpu: 0.0.40
codegen_flags: <defaults>
</compile_context>

<pallas_src>
import jax
import jax.numpy as jnp
from jax.experimental import pallas as pl
from jax.experimental.pallas import tpu as pltpu


def _masked_merge_kernel(pad_ref, img_ref, mask_ref, out_ref):
    # pad_ref : (1, C, 1, 1) or (1, C, 1)   resident per-channel constants
    # img_ref : (BN, C, R, LANE) or (1, C, T)
    # mask_ref: (BN, 1, R, LANE) or (1, 1, T)   broadcast over channels
    # out_ref : same shape/dtype as img_ref
    img = img_ref[...]
    pad = pad_ref[...]
    m = mask_ref[...]
    if jnp.issubdtype(m.dtype, jnp.floating):
        # Faithful to the PyTorch formula (also handles soft masks).
        mf = m.astype(img.dtype)
        out_ref[...] = img * mf + pad * (1 - mf)
    elif m.dtype == jnp.bool_:
        out_ref[...] = jnp.where(m, img, pad)
    else:
        out_ref[...] = jnp.where(m != 0, img, pad)


# Spatial elements (per channel) moved per grid step on the dense path:
# 256K * (3 ch * 4 B * 2 [read+write] + 4 B mask) ~= 7 MiB HBM / step,
# ~14 MiB of double-buffered VMEM.
_TARGET_SPATIAL = 256 * 1024
# Lane-tile cap for the sublane-sparse fallback (kept small: blocks pad to 8
# sublanes there, so VMEM per tile is ~3x larger than the data).
_FALLBACK_LANES = 64 * 1024  # multiple of 128


def _sublane_multiple(dtype):
    # Min second-to-last block multiple: 8 for 32-bit, 16 for 16-bit, 32 for 8-bit/bool.
    return max(8, 32 // jnp.dtype(dtype).itemsize)


def masked_merge(image, mask, pad_value):
    """image: (N, C, H, W); mask: (N, 1, H, W); pad_value: (C,)."""
    N, C, H, W = image.shape
    assert mask.shape == (N, 1, H, W)
    assert pad_value.shape == (C,)

    dtype = image.dtype
    L = H * W
    pad = pad_value.astype(dtype)

    compiler_params = pltpu.CompilerParams(
        dimension_semantics=("parallel", "parallel"),
        vmem_limit_bytes=32 << 20,
    )

    # ---- dense-sublane path: H*W divisible by 128 --------------------------
    lane = next((c for c in (1024, 512, 256, 128) if L % c == 0), None)
    if lane is not None:
        rtot = L // lane
        sub = max(_sublane_multiple(dtype), _sublane_multiple(mask.dtype))
        r_target = max(1, _TARGET_SPATIAL // lane)

        if rtot <= r_target:
            # Whole image fits in one step; block several images per step.
            r = rtot
            bn_want = max(1, min(N, _TARGET_SPATIAL // (rtot * lane)))
            bn = next(b for b in range(bn_want, 0, -1) if N % b == 0)
        else:
            bn = 1
            r_cap = max(sub, (r_target // sub) * sub)
            # Prefer an even divisor of rtot near the cap (no ragged block);
            # otherwise take the cap and let Pallas mask one ragged last block.
            r = next((c for c in range(r_cap, max(sub, r_cap // 2) - 1, -sub)
                      if rtot % c == 0), r_cap)
            # Keep at least ~8 grid steps so both v7x TensorCores stay busy.
            while N * pl.cdiv(rtot, r) < 8 and r >= 2 * sub:
                r = max(sub, ((r // 2) // sub) * sub)

        img_v = image.reshape(N, C, rtot, lane)      # free reshape (row-major)
        mask_v = mask.reshape(N, 1, rtot, lane)
        pad_v = pad.reshape(1, C, 1, 1)
        grid = (N // bn, pl.cdiv(rtot, r))

        out = pl.pallas_call(
            _masked_merge_kernel,
            out_shape=jax.ShapeDtypeStruct((N, C, rtot, lane), dtype),
            grid_spec=pltpu.PrefetchScalarGridSpec(
                num_scalar_prefetch=0,
                grid=grid,
                in_specs=[
                    # pad constants: block index never changes -> fetched once
                    pl.BlockSpec((1, C, 1, 1), lambda nb, tb: (0, 0, 0, 0)),
                    pl.BlockSpec((bn, C, r, lane), lambda nb, tb: (nb, 0, tb, 0)),
                    pl.BlockSpec((bn, 1, r, lane), lambda nb, tb: (nb, 0, tb, 0)),
                ],
                out_specs=pl.BlockSpec((bn, C, r, lane),
                                       lambda nb, tb: (nb, 0, tb, 0)),
            ),
            compiler_params=compiler_params,
        )(pad_v, img_v, mask_v)
        return out.reshape(N, C, H, W)

    # ---- fallback: lane-only tiling for awkward H*W (sublane-sparse) -------
    t = L if L <= _FALLBACK_LANES else _FALLBACK_LANES
    img_v = image.reshape(N, C, L)
    mask_v = mask.reshape(N, 1, L)
    pad_v = pad.reshape(1, C, 1)
    grid = (N, pl.cdiv(L, t))

    out = pl.pallas_call(
        _masked_merge_kernel,
        out_shape=jax.ShapeDtypeStruct((N, C, L), dtype),
        grid_spec=pltpu.PrefetchScalarGridSpec(
            num_scalar_prefetch=0,
            grid=grid,
            in_specs=[
                pl.BlockSpec((1, C, 1), lambda n, tb: (0, 0, 0)),
                pl.BlockSpec((1, C, t), lambda n, tb: (n, 0, tb)),
                pl.BlockSpec((1, 1, t), lambda n, tb: (n, 0, tb)),
            ],
            out_specs=pl.BlockSpec((1, C, t), lambda n, tb: (n, 0, tb)),
        ),
        compiler_params=compiler_params,
    )(pad_v, img_v, mask_v)
    return out.reshape(N, C, H, W)


if __name__ == "__main__":
    key = jax.random.PRNGKey(0)
    k_img, k_mask = jax.random.split(key)

    N, C, H, W = 2, 3, 16, 16
    image = jax.random.normal(k_img, (N, C, H, W), dtype=jnp.float32)
    # binary float mask broadcast over channels (as a (N,1,H,W) torch mask)
    mask = (jax.random.uniform(k_mask, (N, 1, H, W)) > 0.5).astype(jnp.float32)

    # deterministic pad_value == the module's __init__ default
    pad_value = jnp.asarray([-1.7922626, -1.7520971, -1.4802198], dtype=jnp.float32)

    out = masked_merge(image, mask, pad_value)
    out = jax.block_until_ready(out)

    # reference in plain JAX (original PyTorch formulation)
    ref = image * mask + pad_value.reshape(1, C, 1, 1) * (1.0 - mask)
    assert jnp.allclose(out, ref, atol=1e-6, rtol=1e-6), "mismatch vs reference"

    print("KERNEL_OK")
</pallas_src>

<mosaic_0001>
module attributes {stable_mosaic.version = 11 : i64} {
  func.func @_masked_merge_kernel(%arg0: i32, %arg1: i32, %arg2: memref<1x3x1x1xf32, #tpu.memory_space<vmem>>, %arg3: memref<2x3x1x256xf32, #tpu.memory_space<vmem>>, %arg4: memref<2x1x1x256xf32, #tpu.memory_space<vmem>>, %arg5: memref<2x3x1x256xf32, #tpu.memory_space<vmem>>) attributes {dimension_semantics = [#tpu.dimension_semantics<parallel>, #tpu.dimension_semantics<parallel>], iteration_bounds = array<i64: 1, 1>, scalar_prefetch = 0 : i64, scratch_operands = 0 : i64, tpu.core_type = #tpu.core_type<tc>, window_params = [{pipeline_mode = #tpu.pipeline_mode<synchronous>, transform_indices = @transform_0, window_bounds = array<i64: 1, 3, 1, 1>}, {transform_indices = @transform_1, window_bounds = array<i64: 2, 3, 1, 256>}, {transform_indices = @transform_2, window_bounds = array<i64: 2, 1, 1, 256>}, {transform_indices = @transform_3, window_bounds = array<i64: 2, 3, 1, 256>}]} {
    %c0 = arith.constant 0 : index
    %c0_0 = arith.constant 0 : index
    %c0_1 = arith.constant 0 : index
    %c0_2 = arith.constant 0 : index
    %0 = vector.load %arg3[%c0, %c0_0, %c0_1, %c0_2] : memref<2x3x1x256xf32, #tpu.memory_space<vmem>>, vector<2x3x1x256xf32>
    %c0_3 = arith.constant 0 : index
    %c0_4 = arith.constant 0 : index
    %c0_5 = arith.constant 0 : index
    %c0_6 = arith.constant 0 : index
    %1 = vector.load %arg2[%c0_3, %c0_4, %c0_5, %c0_6] : memref<1x3x1x1xf32, #tpu.memory_space<vmem>>, vector<1x3x1x1xf32>
    %c0_7 = arith.constant 0 : index
    %c0_8 = arith.constant 0 : index
    %c0_9 = arith.constant 0 : index
    %c0_10 = arith.constant 0 : index
    %2 = vector.load %arg4[%c0_7, %c0_8, %c0_9, %c0_10] : memref<2x1x1x256xf32, #tpu.memory_space<vmem>>, vector<2x1x1x256xf32>
    %3 = vector.broadcast %2 : vector<2x1x1x256xf32> to vector<2x3x1x256xf32>
    %4 = arith.mulf %0, %3 : vector<2x3x1x256xf32>
    %cst = arith.constant 1.000000e+00 : f32
    %5 = vector.broadcast %cst : f32 to vector<2x1x1x256xf32>
    %6 = arith.subf %5, %2 : vector<2x1x1x256xf32>
    %7 = vector.broadcast %1 : vector<1x3x1x1xf32> to vector<2x3x1x256xf32>
    %8 = vector.broadcast %6 : vector<2x1x1x256xf32> to vector<2x3x1x256xf32>
    %9 = arith.mulf %7, %8 : vector<2x3x1x256xf32>
    %10 = arith.addf %4, %9 : vector<2x3x1x256xf32>
    %c0_11 = arith.constant 0 : index
    %c0_12 = arith.constant 0 : index
    %c0_13 = arith.constant 0 : index
    %c0_14 = arith.constant 0 : index
    %11 = vector.load %arg5[%c0_11, %c0_12, %c0_13, %c0_14] : memref<2x3x1x256xf32, #tpu.memory_space<vmem>>, vector<2x3x1x256xf32>
    tpu.vector_store %arg5[%c0_11, %c0_12, %c0_13, %c0_14], %10 {strides = array<i32>} : memref<2x3x1x256xf32, #tpu.memory_space<vmem>>, vector<2x3x1x256xf32>,
    return
  }
  func.func @transform_0(%arg0: i32, %arg1: i32) -> (i32, i32, i32, i32) {
    %c0_i32 = arith.constant 0 : i32
    %c0_i32_0 = arith.constant 0 : i32
    %c0_i32_1 = arith.constant 0 : i32
    %c0_i32_2 = arith.constant 0 : i32
    %c0_i32_3 = arith.constant 0 : i32
    return %c0_i32, %c0_i32_0, %c0_i32_1, %c0_i32_2 : i32, i32, i32, i32
  }
  func.func @transform_1(%arg0: i32, %arg1: i32) -> (i32, i32, i32, i32) {
    %c0_i32 = arith.constant 0 : i32
    %c0_i32_0 = arith.constant 0 : i32
    %c0_i32_1 = arith.constant 0 : i32
    return %arg0, %c0_i32, %arg1, %c0_i32_0 : i32, i32, i32, i32
  }
  func.func @transform_2(%arg0: i32, %arg1: i32) -> (i32, i32, i32, i32) {
    %c0_i32 = arith.constant 0 : i32
    %c0_i32_0 = arith.constant 0 : i32
    %c0_i32_1 = arith.constant 0 : i32
    return %arg0, %c0_i32, %arg1, %c0_i32_0 : i32, i32, i32, i32
  }
  func.func @transform_3(%arg0: i32, %arg1: i32) -> (i32, i32, i32, i32) {
    %c0_i32 = arith.constant 0 : i32
    %c0_i32_0 = arith.constant 0 : i32
    %c0_i32_1 = arith.constant 0 : i32
    return %arg0, %c0_i32, %arg1, %c0_i32_0 : i32, i32, i32, i32
  }
}

</mosaic_0001>

<llo_original>
// kernel: tpu_custom_call.1
$region0: #{tpu_custom_call.1}
  #allocation0 [shape = 'u32[]', space=smem, size = 0x4, offset = 0x4, fixed_abs, tag = 'smem constant byte address 0x4 - core index']
  #allocation1 [shape = 'u32[144,128]{1,0:T(1,128)}', space=vmem, size = 0x12000, scoped, tag = 'internal scratch']
  %s0 = inlined_call_operand.vmem [shape: f32[1,3,1,1], index: 0, kind: input, shape index: {}]
  %s1 = inlined_call_operand.hbm [shape: f32[2,3,1,256], index: 1, kind: input, shape index: {}]
  %s2 = inlined_call_operand.vmem [shape: f32[2,1,1,256], index: 2, kind: input, shape index: {}]
  %s3 = inlined_call_operand.hbm [shape: f32[2,3,1,256], index: 3, kind: output, shape index: {}]
  %s4 = sld [smem:[#allocation0]]
  $region26: #{tpu_custom_call.1} parent=0
    _
  %s6 = ssub.s32 1, %s4
  %s7 = scalar_select 0, %s6, %s4
  $region1: #{tpu_custom_call.1} parent=0
    #allocation2 [shape = 'u8[6144]{0}', space=vmem, size = 0x1800, scoped, tag = 'input window, operand 1, single buffered']
    #allocation3 [shape = 's32[1]{0}', space=sflag, size = 0x4, scoped, tag = 'scoped memory for tpu_custom_call.1']
    #allocation4 [shape = 's32[1]{0}', space=sflag, size = 0x4, scoped, tag = 'scoped memory for tpu_custom_call.1']
    #allocation5 [shape = 'u8[6144]{0}', space=vmem, size = 0x1800, scoped, tag = 'output window, operand 0, single buffered']
    %8 = vsyncpa [#allocation3], 0
    %9 = vsyncpa [#allocation4], 0
    // Predicated region
    $region2: #{tpu_custom_call.1} parent=1 // pred_check
      _
    $region3: #{tpu_custom_call.1} parent=1 // pred_check_branch
      %11 = sbr.rel (0) target = $region5
    $region4: #{tpu_custom_call.1} parent=1 // pred_region
      _
    $region5: #{tpu_custom_call.1} parent=1 // pred_fallthru
      _
    // Predicated region
    $region6: #{tpu_custom_call.1} parent=1 // pred_check
      _
    $region7: #{tpu_custom_call.1} parent=1 // pred_check_branch
      %13 = sbr.rel (0) target = $region9
    $region8: #{tpu_custom_call.1} parent=1 // pred_region
      %s15 = ssub.s32 192, 192
      %16 = vsyncadd [#allocation3], %s15
      %s17 = sshll.u32 [#allocation2], 4
      %s18 = int_to_ptr.vmem [resolvable:$true] %s17
      %23 = dma.hbm_to_vmem [thread:$0]  %s1, 192, %s18, [#allocation3], 32, 32, 2
    $region9: #{tpu_custom_call.1} parent=1 // pred_fallthru
      _
    // Predicated region
    $region10: #{tpu_custom_call.1} parent=1 // pred_check
      _
    $region11: #{tpu_custom_call.1} parent=1 // pred_check_branch
      %25 = sbr.rel (0) target = $region13
    $region12: #{tpu_custom_call.1} parent=1 // pred_region
      _
    $region13: #{tpu_custom_call.1} parent=1 // pred_fallthru
      _
    // Predicated region
    $region14: #{tpu_custom_call.1} parent=1 // pred_check
      _
    $region15: #{tpu_custom_call.1} parent=1 // pred_check_branch
      %27 = sbr.rel (0) target = $region17
    $region16: #{tpu_custom_call.1} parent=1 // pred_region
      %28 = dma.done [#allocation3], 192
    $region17: #{tpu_custom_call.1} parent=1 // pred_fallthru
      _
    %v29 = vld [vmem:[#allocation2] sm:$0x3]
    %v30 = vld [vmem:[#allocation2 + $0x2] sm:$0x3]
    %v31 = vld [vmem:[#allocation2 + $0x4] sm:$0x3]
    %v32 = vld [vmem:[#allocation2 + $0x6] sm:$0x3]
    %v33 = vld [vmem:[#allocation2 + $0x8] sm:$0x3]
    %v34 = vld [vmem:[#allocation2 + $0xa] sm:$0x3]
    %v35 = vld [vmem:[%s0] sm:$0x1]
    %v36 = vld [vmem:[%s0 + $0x1] sm:$0x1]
    %v37 = vld [vmem:[%s0 + $0x2] sm:$0x1]
    %v38 = vld [vmem:[%s2] sm:$0x3]
    %v39 = vld [vmem:[%s2 + $0x2] sm:$0x3]
    %v40 = vmul.f32 %v29, %v38
    %v41 = vmul.f32 %v30, %v38
    %v42 = vmul.f32 %v31, %v38
    %v43 = vmul.f32 %v32, %v39
    %v44 = vmul.f32 %v33, %v39
    %v45 = vmul.f32 %v34, %v39
    %v46 = vsub.f32 1.0, %v38
    %v47 = vsub.f32 1.0, %v39
    %49 = vset.pattern.permute.xlu0 0
    %50 = vperm.xlu0 %49, %v35
    %v51 = vpop.permute.xlu0 %50
    %v53 = vlaneseq
    %v54 = vshrl.u32 %v53, 7
    %v55 = vsub.s32 0, %v54
    %v56 = vrot.slane %v51, %v55
    %58 = vset.pattern.permute.xlu0 0
    %59 = vperm.xlu0 %58, %v36
    %v60 = vpop.permute.xlu0 %59
    %v62 = vlaneseq
    %v63 = vshrl.u32 %v62, 7
    %v64 = vsub.s32 0, %v63
    %v65 = vrot.slane %v60, %v64
    %67 = vset.pattern.permute.xlu0 0
    %68 = vperm.xlu0 %67, %v37
    %v69 = vpop.permute.xlu0 %68
    %v71 = vlaneseq
    %v72 = vshrl.u32 %v71, 7
    %v73 = vsub.s32 0, %v72
    %v74 = vrot.slane %v69, %v73
    %v75 = vmul.f32 %v56, %v46
    %v76 = vmul.f32 %v65, %v46
    %v77 = vmul.f32 %v74, %v46
    %v78 = vmul.f32 %v56, %v47
    %v79 = vmul.f32 %v65, %v47
    %v80 = vmul.f32 %v74, %v47
    %v81 = vadd.f32 %v40, %v75
    %v82 = vadd.f32 %v41, %v76
    %v83 = vadd.f32 %v42, %v77
    %v84 = vadd.f32 %v43, %v78
    %v85 = vadd.f32 %v44, %v79
    %v86 = vadd.f32 %v45, %v80
    %v87 = vlaneseq
    %vm88 = vcmp.ge.s32.totalorder %v87, 0
    %vm89 = vcmp.lt.s32.totalorder %v87, 256
    %vm90 = vmand %vm88, %vm89
    %91 = vst.msk [vmem:[#allocation5] sm:$0x3] %vm90, %v81
    %92 = vst.msk [vmem:[#allocation5 + $0x2] sm:$0x3] %vm90, %v82
    %93 = vst.msk [vmem:[#allocation5 + $0x4] sm:$0x3] %vm90, %v83
    %94 = vst.msk [vmem:[#allocation5 + $0x6] sm:$0x3] %vm90, %v84
    %95 = vst.msk [vmem:[#allocation5 + $0x8] sm:$0x3] %vm90, %v85
    %96 = vst.msk [vmem:[#allocation5 + $0xa] sm:$0x3] %vm90, %v86
    // Predicated region
    $region18: #{tpu_custom_call.1} parent=1 // pred_check
      _
    $region19: #{tpu_custom_call.1} parent=1 // pred_check_branch
      %98 = sbr.rel (0) target = $region21
    $region20: #{tpu_custom_call.1} parent=1 // pred_region
      %s100 = ssub.s32 192, 192
      %101 = vsyncadd [#allocation4], %s100
      %s102 = sshll.u32 [#allocation5], 4
      %s103 = int_to_ptr.vmem [resolvable:$true] %s102
      %108 = dma.vmem_to_hbm [thread:$0]  %s103, 192, %s3, [#allocation4], 32, 32, 2
    $region21: #{tpu_custom_call.1} parent=1 // pred_fallthru
      _
    // Predicated region
    $region22: #{tpu_custom_call.1} parent=1 // pred_check
      _
    $region23: #{tpu_custom_call.1} parent=1 // pred_check_branch
      %110 = sbr.rel (0) target = $region25
    $region24: #{tpu_custom_call.1} parent=1 // pred_region
      %111 = dma.done [#allocation4], 192
    $region25: #{tpu_custom_call.1} parent=1 // pred_fallthru
      _
    %112 = vsyncpa [#allocation3], 1
    %113 = vsyncpa [#allocation4], 1

</llo_original>
